<compile_context>
chip_gen: v5e
topology: v5e:2x2
jax: 0.10.0
libtpu: 0.0.40
codegen_flags: <defaults>
</compile_context>

<pallas_src>
import functools
import math

import jax
import jax.numpy as jnp
from jax import lax
from jax.experimental import pallas as pl
from jax.experimental.pallas import tpu as pltpu

EPS = 1e-4
MP_SILU_DIV = 0.596
MP_SUM_T = 0.3

# The fused qkv MPConv1D in the reference packs output channels as
# out_channel = 3*c + j (j in {q, k, v}); flip if the reference chunks
# [q; k; v] contiguously instead.
QKV_INTERLEAVED = True


# ----------------------------------------------------------------------------
# tiling helpers
# ----------------------------------------------------------------------------
_TARGETS = None


def _tile_targets():
    """Per-generation tile targets (v5e gets 128-wide MXU-matched tiles)."""
    global _TARGETS
    if _TARGETS is None:
        tn, tl, ta = 256, 256, 256
        try:
            kind = jax.devices()[0].device_kind.lower()
            if "v5 lite" in kind or "v5e" in kind or "v5lite" in kind:
                tn, tl, ta = 128, 256, 128
        except Exception:
            pass
        _TARGETS = dict(tn=tn, tl=tl, attn=ta)
    return _TARGETS


def _pick_l_tile(L, target, quantum=8):
    for t in (512, 256, 128, 64, 32, 16, 8):
        if t <= target and t % quantum == 0 and L % t == 0:
            return t
    return L


def _pick_c_tile(C, target):
    if C <= target:
        return C
    for t in (256, 128):
        if t <= target and C % t == 0:
            return t
    return C


def _cparams(dims, est_bytes):
    vmem = int(min(max(2 * est_bytes, 32 * 1024 * 1024), 56 * 1024 * 1024))
    return pltpu.CompilerParams(dimension_semantics=dims, vmem_limit_bytes=vmem)


# ----------------------------------------------------------------------------
# Pallas kernels
# ----------------------------------------------------------------------------
def _conv_kernel(*refs, K, TL, nL, do_norm, do_act, upsample, post_norm,
                 has_res, res_t, clip, has_sc):
    """(pixel-norm)->(mp_silu)->(2x dup)->conv1d->(group-norm|mp_sum|clip).

    refs: x_main (1, TLx, Cin), [x_left (1,8,Cin), x_right (1,8,Cin)],
          w (K*Cin, TN), [w_sc (Cin, TN)], [res (1, TL, TN)],
          out (1, TL, TN), [out_sc (1, TL, TN)].
    """
    it = iter(refs)
    xm_ref = next(it)
    if K > 1:
        xl_ref = next(it)
        xr_ref = next(it)
    w_ref = next(it)
    wsc_ref = next(it) if has_sc else None
    r_ref = next(it) if has_res else None
    o_ref = next(it)
    osc_ref = next(it) if has_sc else None

    p = K // 2
    xm = xm_ref[0]                                     # (TLx, Cin) bf16
    cin = xm.shape[-1]

    if K > 1:
        l_idx = pl.program_id(2)
        left = xl_ref[0, 8 - p:8, :]                   # (p, Cin)
        right = xr_ref[0, 0:p, :]                      # (p, Cin)
        # halo rows are garbage (clamped block) at the sequence edges -> zero
        left = jnp.where(l_idx == 0, jnp.zeros_like(left), left)
        right = jnp.where(l_idx == nL - 1, jnp.zeros_like(right), right)
        win = jnp.concatenate([left, xm, right], axis=0)   # (TLx + 2p, Cin)
    else:
        win = xm

    if do_norm or do_act:
        x = win.astype(jnp.float32)
        if do_norm:                                    # pixel norm over channels
            nrm = jnp.sqrt(jnp.sum(x * x, axis=-1, keepdims=True))
            x = x / (EPS + nrm * (1.0 / math.sqrt(cin)))
        if do_act:                                     # mp_silu
            x = x * jax.nn.sigmoid(x) * (1.0 / MP_SILU_DIV)
        xw = x.astype(jnp.bfloat16)
    else:
        xw = win

    if upsample:                                       # fused nearest-exact 2x
        half = TL // 2
        mid = xw[p:p + half]
        dup = jnp.broadcast_to(mid[:, None, :], (half, 2, cin)).reshape(TL, cin)
        xw = jnp.concatenate([xw[0:p], dup, xw[p + half:p + half + p]], axis=0)

    if K > 1:                                          # im2col slab, one matmul
        slab = jnp.concatenate([xw[k:k + TL] for k in range(K)], axis=-1)
    else:
        slab = xw

    acc = jnp.dot(slab, w_ref[...], preferred_element_type=jnp.float32)  # (TL, TN)

    if post_norm:                                      # q/k/v group pixel norm
        tn = acc.shape[-1]
        nrm = jnp.sqrt(jnp.sum(acc * acc, axis=-1, keepdims=True))
        acc = acc / (EPS + nrm * (1.0 / math.sqrt(tn)))

    y = acc
    if has_res:                                        # fused mp_sum(residual, y)
        r = r_ref[0].astype(jnp.float32)
        y = (r * (1.0 - res_t) + y * res_t) * (
            1.0 / math.sqrt((1.0 - res_t) ** 2 + res_t ** 2))
    if clip is not None:                               # fused clip_act
        y = jnp.clip(y, -clip, clip)
    o_ref[0] = y.astype(o_ref.dtype)

    if has_sc:                                         # fused 1x1 nin_shortcut
        sc = jnp.dot(xm, wsc_ref[...], preferred_element_type=jnp.float32)
        osc_ref[0] = sc.astype(osc_ref.dtype)


def _pixel_norm_f32(x):
    c = x.shape[-1]
    nrm = jnp.sqrt(jnp.sum(x * x, axis=-1, keepdims=True))
    return x / (EPS + nrm * (1.0 / math.sqrt(c)))


def _flash_attn_kernel(q_ref, k_ref, v_ref, o_ref, m_sc, l_sc, acc_sc, qn_sc,
                       *, scale, pre_normed):
    """Single-head flash attention; q/k/v optionally pixel-normed in-kernel."""
    ki = pl.program_id(2)

    @pl.when(ki == 0)
    def _():
        m_sc[...] = jnp.full(m_sc.shape, -1e30, m_sc.dtype)
        l_sc[...] = jnp.zeros(l_sc.shape, l_sc.dtype)
        acc_sc[...] = jnp.zeros(acc_sc.shape, acc_sc.dtype)
        q = q_ref[0]
        if not pre_normed:                             # q norm hoisted out of KV loop
            q = _pixel_norm_f32(q.astype(jnp.float32)).astype(jnp.bfloat16)
        qn_sc[0] = q.astype(jnp.bfloat16)

    k = k_ref[0]
    v = v_ref[0]
    if not pre_normed:
        k = _pixel_norm_f32(k.astype(jnp.float32)).astype(jnp.bfloat16)
        v = _pixel_norm_f32(v.astype(jnp.float32)).astype(jnp.bfloat16)

    s = lax.dot_general(qn_sc[0], k, (((1,), (1,)), ((), ())),
                        preferred_element_type=jnp.float32) * scale      # (tq, tk)

    m_prev = m_sc[0]                                                     # (tq, 128)
    m_new = jnp.maximum(m_prev, jnp.max(s, axis=-1, keepdims=True))
    alpha = jnp.exp(m_prev - m_new)
    prob = jnp.exp(s - m_new[:, 0:1])
    l_sc[0] = alpha * l_sc[0] + jnp.sum(prob, axis=-1, keepdims=True)
    acc_sc[0] = alpha[:, 0:1] * acc_sc[0] + jnp.dot(
        prob.astype(jnp.bfloat16), v, preferred_element_type=jnp.float32)
    m_sc[0] = m_new

    @pl.when(ki == pl.num_programs(2) - 1)
    def _():
        o_ref[0] = (acc_sc[0] * pl.reciprocal(l_sc[0][:, 0:1], approx=True)
                    ).astype(o_ref.dtype)


# ----------------------------------------------------------------------------
# wrappers
# ----------------------------------------------------------------------------
def mp_conv1d(x, w_flat, *, do_norm=False, do_act=False, residual=None,
              res_t=MP_SUM_T, clip=None, shortcut_w=None, upsample=False,
              post_norm_groups=None, out_dtype=jnp.bfloat16, l_tile=None):
    """MPConv1D layer; weights pre-normalized/flattened by prepare_params.

    x:      (B, Lx, Cin) channels-last activations.
    w_flat: (K*Cin, Cout) bf16, tap-major rows (tap k -> rows [k*Cin,(k+1)*Cin)).
    """
    B, Lx, Cin = x.shape
    KC, Cout = w_flat.shape
    K = KC // Cin
    assert K * Cin == KC and K in (1, 3)
    p = K // 2
    if upsample:
        assert K == 3
    Lout = 2 * Lx if upsample else Lx
    if K > 1:
        assert Lx % 8 == 0 and Lx >= 8, "halo tiling needs Lx to be a multiple of 8"

    tgt = _tile_targets()
    if l_tile is not None:
        TL = l_tile
    else:
        TL = _pick_l_tile(Lout, tgt['tl'], quantum=16 if upsample else 8)
    assert Lout % TL == 0
    if post_norm_groups is not None:
        assert Cout % post_norm_groups == 0
        TN = post_norm_groups
        assert TN % 128 == 0 or TN == Cout, "post-norm group must be lane-aligned"
    else:
        TN = _pick_c_tile(Cout, tgt['tn'])
    TLx = TL // 2 if upsample else TL
    nL = Lout // TL
    nN = Cout // TN

    has_res = residual is not None
    has_sc = shortcut_w is not None
    assert not (has_sc and upsample)

    xb = x.astype(jnp.bfloat16)

    in_specs = [pl.BlockSpec((1, TLx, Cin), lambda b, n, l: (b, l, 0))]
    inputs = [xb]
    if K > 1:
        s8 = TLx // 8
        n8 = Lx // 8
        in_specs.append(pl.BlockSpec(
            (1, 8, Cin), lambda b, n, l: (b, jnp.maximum(l * s8 - 1, 0), 0)))
        in_specs.append(pl.BlockSpec(
            (1, 8, Cin), lambda b, n, l: (b, jnp.minimum((l + 1) * s8, n8 - 1), 0)))
        inputs += [xb, xb]
    in_specs.append(pl.BlockSpec((KC, TN), lambda b, n, l: (0, n)))
    inputs.append(w_flat)
    if has_sc:
        assert shortcut_w.shape == (Cin, Cout)
        in_specs.append(pl.BlockSpec((Cin, TN), lambda b, n, l: (0, n)))
        inputs.append(shortcut_w)
    if has_res:
        assert residual.shape == (B, Lout, Cout)
        in_specs.append(pl.BlockSpec((1, TL, TN), lambda b, n, l: (b, l, n)))
        inputs.append(residual.astype(jnp.bfloat16))

    out_shape = [jax.ShapeDtypeStruct((B, Lout, Cout), out_dtype)]
    # TODO(synk): fold a factor of L into the last dim when Cout < 128
    # (conv_out) so the final store is lane-dense instead of vst.msk.
    out_specs = [pl.BlockSpec((1, TL, TN), lambda b, n, l: (b, l, n))]
    if has_sc:
        out_shape.append(jax.ShapeDtypeStruct((B, Lout, Cout), jnp.bfloat16))
        out_specs.append(pl.BlockSpec((1, TL, TN), lambda b, n, l: (b, l, n)))

    kernel = functools.partial(
        _conv_kernel, K=K, TL=TL, nL=nL, do_norm=do_norm, do_act=do_act,
        upsample=upsample, post_norm=post_norm_groups is not None,
        has_res=has_res, res_t=res_t, clip=clip, has_sc=has_sc)

    # scoped-VMEM estimate (double-buffered blocks + f32 temporaries)
    obytes = jnp.dtype(out_dtype).itemsize
    blk = (TLx * Cin + (16 * Cin if K > 1 else 0) + KC * TN
           + (Cin * TN if has_sc else 0) + (TL * TN if has_res else 0)) * 2 \
        + TL * TN * obytes + (TL * TN * 2 if has_sc else 0)
    tmp = (TLx + 2 * p) * Cin * 4 + TL * KC * 2 + TL * TN * 4 * (2 if has_sc else 1)
    est = 2 * blk + tmp

    res = pl.pallas_call(
        kernel,
        out_shape=tuple(out_shape),
        grid=(B, nN, nL),
        in_specs=in_specs,
        out_specs=tuple(out_specs),
        compiler_params=_cparams(("parallel", "parallel", "parallel"), est),
    )(*inputs)
    return (res[0], res[1]) if has_sc else res[0]


def attention_from_qkv(qkv, C, *, pre_normed, out_dtype=jnp.bfloat16, l_tile=None):
    """AttnBlock1D flash attention over a fused (B, L, 3C) qkv activation."""
    B, L, C3 = qkv.shape
    assert C3 == 3 * C
    tgt = _tile_targets()
    tq = l_tile if l_tile is not None else _pick_l_tile(L, tgt['attn'])
    assert L % tq == 0
    tk = tq
    kernel = functools.partial(_flash_attn_kernel, scale=1.0 / math.sqrt(C),
                               pre_normed=pre_normed)
    qkv = qkv.astype(jnp.bfloat16)

    if C % 128 == 0:
        # one fused array viewed three times with lane-aligned channel offsets
        q_in = k_in = v_in = qkv
        q_spec = pl.BlockSpec((1, tq, C), lambda b, qi, ki: (b, qi, 0))
        k_spec = pl.BlockSpec((1, tk, C), lambda b, qi, ki: (b, ki, 1))
        v_spec = pl.BlockSpec((1, tk, C), lambda b, qi, ki: (b, ki, 2))
    else:
        # small-C fallback: slice q/k/v in the wrapper (tiny channel counts only)
        q_in, k_in, v_in = qkv[..., :C], qkv[..., C:2 * C], qkv[..., 2 * C:]
        q_spec = pl.BlockSpec((1, tq, C), lambda b, qi, ki: (b, qi, 0))
        k_spec = pl.BlockSpec((1, tk, C), lambda b, qi, ki: (b, ki, 0))
        v_spec = pl.BlockSpec((1, tk, C), lambda b, qi, ki: (b, ki, 0))

    est = (2 * ((tq * C + 2 * tk * C) * 2 + tq * C * jnp.dtype(out_dtype).itemsize)
           + 2 * tq * 128 * 4 + tq * C * 4 + tq * C * 2 + 3 * tq * tk * 4)

    return pl.pallas_call(
        kernel,
        out_shape=jax.ShapeDtypeStruct((B, L, C), out_dtype),
        grid=(B, L // tq, L // tk),
        in_specs=[q_spec, k_spec, v_spec],
        out_specs=pl.BlockSpec((1, tq, C), lambda b, qi, ki: (b, qi, 0)),
        scratch_shapes=[
            pltpu.VMEM((1, tq, 128), jnp.float32),   # running max
            pltpu.VMEM((1, tq, 128), jnp.float32),   # running denominator
            pltpu.VMEM((1, tq, C), jnp.float32),     # running accumulator
            pltpu.VMEM((1, tq, C), jnp.bfloat16),    # (normalized) q tile
        ],
        compiler_params=_cparams(("parallel", "parallel", "arbitrary"), est),
    )(q_in, k_in, v_in)


# ----------------------------------------------------------------------------
# Decoder1D building blocks
# ----------------------------------------------------------------------------
def resnet_block(x, p, *, clip=None):
    if 'nin_shortcut' in p:
        h, sc = mp_conv1d(x, p['conv1'], do_norm=True, do_act=True,
                          shortcut_w=p['nin_shortcut'])
    else:
        h = mp_conv1d(x, p['conv1'], do_norm=True, do_act=True)
        sc = x
    return mp_conv1d(h, p['conv2'], do_norm=True, do_act=True,
                     residual=sc, clip=clip)


def attn_block(x, p, *, clip=None):
    C = x.shape[-1]
    fused_norm = (C % 128 == 0)
    qkv = mp_conv1d(x, p['qkv'],
                    post_norm_groups=C if fused_norm else None)
    h = attention_from_qkv(qkv, C, pre_normed=fused_norm)
    return mp_conv1d(h, p['proj_out'], residual=x, clip=clip)


def decoder1d_forward(z, prep, cfg):
    clip = cfg['clip_act']
    num_layers = len(cfg['ch_mult'])
    down_layers = [i + 1 for i in cfg['down_layers']]

    h = mp_conv1d(z, prep['conv_in'])
    h = resnet_block(h, prep['mid_block_1'])
    h = attn_block(h, prep['mid_attn_1'])
    h = resnet_block(h, prep['mid_block_2'], clip=clip)

    for i_level in reversed(range(num_layers)):
        lvl = prep['up'][i_level]
        has_attn = len(lvl['attn']) > 0
        for i_block in range(cfg['num_res_blocks'] + 1):
            h = resnet_block(h, lvl['block'][i_block],
                             clip=None if has_attn else clip)
            if has_attn:
                h = attn_block(h, lvl['attn'][i_block], clip=clip)
        if i_level in down_layers:
            h = mp_conv1d(h, lvl['upsample'], upsample=True)

    # final mp_silu fused into conv_out; learnable gain folded at prep time
    return mp_conv1d(h, prep['conv_out'], do_act=True, out_dtype=jnp.float32)


# ----------------------------------------------------------------------------
# parameters: deterministic raw init + one-time prepared (normalized) weights
# ----------------------------------------------------------------------------
class _KeyGen:
    def __init__(self, key):
        self.key = key

    def __call__(self):
        self.key, sub = jax.random.split(self.key)
        return sub


def init_raw_params(key, cfg):
    kg = _KeyGen(key)
    dim, ch_mult = cfg['dim'], cfg['ch_mult']
    num_layers, nrb, ks = len(ch_mult), cfg['num_res_blocks'], cfg['kernel_size']
    attn_layers = cfg['attn_layers']
    down_layers = [i + 1 for i in cfg['down_layers']]

    def conv_w(cout, cin, k):
        return jax.random.normal(kg(), (cout, cin, k), jnp.float32)

    def resblock_p(cin, cout):
        p = {'conv1': conv_w(cout, cin, 3), 'conv2': conv_w(cout, cout, 3)}
        if cin != cout:
            p['nin_shortcut'] = conv_w(cout, cin, 1)
        return p

    def attnblock_p(c):
        return {'qkv': conv_w(3 * c, c, 1), 'proj_out': conv_w(c, c, 1)}

    block_in = dim * ch_mult[num_layers - 1]
    params = {'conv_in': conv_w(block_in, cfg['embed_dim'], ks),
              'mid_block_1': resblock_p(block_in, block_in),
              'mid_attn_1': attnblock_p(block_in),
              'mid_block_2': resblock_p(block_in, block_in)}
    up = [None] * num_layers
    for i_level in reversed(range(num_layers)):
        block_out = dim * ch_mult[i_level]
        blocks, attns = [], []
        for _ in range(nrb + 1):
            blocks.append(resblock_p(block_in, block_out))
            block_in = block_out
            if i_level in attn_layers:
                attns.append(attnblock_p(block_in))
        lvl = {'block': blocks, 'attn': attns}
        if i_level in down_layers:
            lvl['upsample'] = conv_w(block_in, block_in, 3)
        up[i_level] = lvl
    params['up'] = up
    params['conv_out'] = conv_w(cfg['out_dim'], block_in, ks)
    params['learnable_gain'] = jnp.zeros((), jnp.float32)
    return params


def _prep_w(w, gain=1.0):
    """MP weight normalization + gain + flatten to tap-major (K*Cin, Cout) bf16."""
    cout, cin, k = w.shape
    fan_in = cin * k
    w32 = w.astype(jnp.float32)
    nrm = jnp.sqrt(jnp.sum(w32 * w32, axis=(1, 2), keepdims=True))
    w_hat = w32 / (EPS + nrm * (1.0 / math.sqrt(fan_in)))
    w_hat = w_hat * (gain / math.sqrt(fan_in))
    return jnp.transpose(w_hat, (2, 1, 0)).reshape(k * cin, cout).astype(jnp.bfloat16)


def prepare_params(raw):
    def prep_res(p):
        out = {'conv1': _prep_w(p['conv1']), 'conv2': _prep_w(p['conv2'])}
        if 'nin_shortcut' in p:
            out['nin_shortcut'] = _prep_w(p['nin_shortcut'])
        return out

    def prep_attn(p):
        w = p['qkv']
        if QKV_INTERLEAVED:   # -> contiguous [q; k; v] along Cout
            w = jnp.concatenate([w[0::3], w[1::3], w[2::3]], axis=0)
        return {'qkv': _prep_w(w), 'proj_out': _prep_w(p['proj_out'])}

    prep = {'conv_in': _prep_w(raw['conv_in']),
            'mid_block_1': prep_res(raw['mid_block_1']),
            'mid_attn_1': prep_attn(raw['mid_attn_1']),
            'mid_block_2': prep_res(raw['mid_block_2'])}
    up = []
    for lvl in raw['up']:
        l = {'block': [prep_res(b) for b in lvl['block']],
             'attn': [prep_attn(a) for a in lvl['attn']]}
        if 'upsample' in lvl:
            l['upsample'] = _prep_w(lvl['upsample'])
        up.append(l)
    prep['up'] = up
    prep['conv_out'] = _prep_w(raw['conv_out'], gain=raw['learnable_gain'] + 1.0)
    return prep


# ----------------------------------------------------------------------------
# small pure-JAX references for self-checks
# ----------------------------------------------------------------------------
def _ref_conv(x, w_flat, K, *, do_norm=False, do_act=False, upsample=False):
    B, L, Cin = x.shape
    x = x.astype(jnp.bfloat16).astype(jnp.float32)
    if do_norm:
        nrm = jnp.sqrt(jnp.sum(x * x, axis=-1, keepdims=True))
        x = x / (EPS + nrm / math.sqrt(Cin))
    if do_act:
        x = x * jax.nn.sigmoid(x) / MP_SILU_DIV
    x = x.astype(jnp.bfloat16).astype(jnp.float32)
    if upsample:
        x = jnp.repeat(x, 2, axis=1)
        L = 2 * L
    p = K // 2
    xp = jnp.pad(x, ((0, 0), (p, p), (0, 0)))
    slab = jnp.concatenate([xp[:, k:k + L, :] for k in range(K)], axis=-1)
    return jnp.einsum('blc,cn->bln', slab, w_flat.astype(jnp.float32))


def _ref_attention(qkv, C):
    x = qkv.astype(jnp.float32)
    q, k, v = x[..., :C], x[..., C:2 * C], x[..., 2 * C:]

    def nrm(u):
        n = jnp.sqrt(jnp.sum(u * u, axis=-1, keepdims=True))
        return (u / (EPS + n / math.sqrt(C))).astype(jnp.bfloat16).astype(jnp.float32)

    q, k, v = nrm(q), nrm(k), nrm(v)
    s = jnp.einsum('bqc,bkc->bqk', q, k) / math.sqrt(C)
    p = jax.nn.softmax(s, axis=-1).astype(jnp.bfloat16).astype(jnp.float32)
    return jnp.einsum('bqk,bkc->bqc', p, v)


def _run_self_checks(key):
    k1, k2, k3, k4, k5 = jax.random.split(key, 5)

    # (1) K=3 conv + pixel-norm + mp_silu across multiple L tiles (halo path)
    x = jax.random.normal(k1, (2, 32, 32), jnp.float32)
    wf = _prep_w(jax.random.normal(k2, (48, 32, 3), jnp.float32))
    got = mp_conv1d(x, wf, do_norm=True, do_act=True, out_dtype=jnp.float32, l_tile=8)
    ref = _ref_conv(x, wf, 3, do_norm=True, do_act=True)
    assert float(jnp.max(jnp.abs(got - ref))) < 2e-2

    # (2) fused nearest-exact 2x upsample conv across multiple L tiles
    x = jax.random.normal(k3, (2, 16, 32), jnp.float32)
    wf = _prep_w(jax.random.normal(k4, (32, 32, 3), jnp.float32))
    got = mp_conv1d(x, wf, upsample=True, out_dtype=jnp.float32, l_tile=16)
    ref = _ref_conv(x, wf, 3, upsample=True)
    assert float(jnp.max(jnp.abs(got - ref))) < 2e-2

    # (3) flash attention vs reference softmax (multi-KV-tile, in-kernel norm)
    qkv = jax.random.normal(k5, (2, 32, 3 * 128), jnp.float32)
    got = attention_from_qkv(qkv, 128, pre_normed=False,
                             out_dtype=jnp.float32, l_tile=8)
    ref = _ref_attention(qkv.astype(jnp.bfloat16), 128)
    assert float(jnp.max(jnp.abs(got - ref))) < 3e-2


# ----------------------------------------------------------------------------
if __name__ == "__main__":
    cfg = dict(dim=64, out_dim=4, ch_mult=(1, 2), num_res_blocks=1,
               attn_layers=[0, 1], down_layers=[0], kernel_size=3,
               in_dim=8, embed_dim=8, clip_act=256.0)

    key = jax.random.PRNGKey(0)
    kp, kz, kc = jax.random.split(key, 3)

    _run_self_checks(kc)

    raw = init_raw_params(kp, cfg)
    prep = prepare_params(raw)        # one-time weight norm / flatten / qkv split

    B, L = 2, 16
    # (B, L, C) channels-last; equals PyTorch z of shape (B, 8, 16).transpose(1, 2)
    z = jax.random.normal(kz, (B, L, cfg['embed_dim']), jnp.float32)

    fwd = jax.jit(functools.partial(decoder1d_forward, cfg=cfg))
    out = jax.block_until_ready(fwd(z, prep))
    assert out.shape == (B, L * 2, cfg['out_dim']), out.shape
    assert bool(jnp.all(jnp.isfinite(out)))
    print("KERNEL_OK")
</pallas_src>

<mosaic_0001>
module attributes {stable_mosaic.version = 11 : i64} {
  func.func @_conv_kernel(%arg0: i32, %arg1: i32, %arg2: i32, %arg3: memref<1x8x32xbf16, #tpu.memory_space<vmem>>, %arg4: memref<1x8x32xbf16, #tpu.memory_space<vmem>>, %arg5: memref<1x8x32xbf16, #tpu.memory_space<vmem>>, %arg6: memref<96x48xbf16, #tpu.memory_space<vmem>>, %arg7: memref<1x8x48xf32, #tpu.memory_space<vmem>>) attributes {dimension_semantics = [#tpu.dimension_semantics<parallel>, #tpu.dimension_semantics<parallel>, #tpu.dimension_semantics<parallel>], iteration_bounds = array<i64: 2, 1, 4>, scalar_prefetch = 0 : i64, scratch_operands = 0 : i64, tpu.core_type = #tpu.core_type<tc>, window_params = [{transform_indices = @transform_0, window_bounds = array<i64: 1, 8, 32>}, {transform_indices = @transform_1, window_bounds = array<i64: 1, 8, 32>}, {transform_indices = @transform_2, window_bounds = array<i64: 1, 8, 32>}, {transform_indices = @transform_3, window_bounds = array<i64: 96, 48>}, {transform_indices = @transform_4, window_bounds = array<i64: 1, 8, 48>}]} {
    %c0 = arith.constant 0 : index
    %c0_0 = arith.constant 0 : index
    %c0_1 = arith.constant 0 : index
    %0 = vector.load %arg3[%c0, %c0_0, %c0_1] : memref<1x8x32xbf16, #tpu.memory_space<vmem>>, vector<1x8x32xbf16>
    %1 = vector.shape_cast %0 : vector<1x8x32xbf16> to vector<8x32xbf16>
    %c0_2 = arith.constant 0 : index
    %c7 = arith.constant 7 : index
    %c0_3 = arith.constant 0 : index
    %2 = vector.load %arg4[%c0_2, %c7, %c0_3] : memref<1x8x32xbf16, #tpu.memory_space<vmem>>, vector<1x1x32xbf16>
    %3 = vector.shape_cast %2 : vector<1x1x32xbf16> to vector<1x32xbf16>
    %c0_4 = arith.constant 0 : index
    %c0_5 = arith.constant 0 : index
    %c0_6 = arith.constant 0 : index
    %4 = vector.load %arg5[%c0_4, %c0_5, %c0_6] : memref<1x8x32xbf16, #tpu.memory_space<vmem>>, vector<1x1x32xbf16>
    %5 = vector.shape_cast %4 : vector<1x1x32xbf16> to vector<1x32xbf16>
    %c0_i32 = arith.constant 0 : i32
    %6 = arith.cmpi eq, %arg2, %c0_i32 : i32
    %cst = arith.constant 0.000000e+00 : bf16
    %7 = vector.broadcast %cst : bf16 to vector<1x32xbf16>
    %8 = arith.select %6, %7, %3 : vector<1x32xbf16>
    %c3_i32 = arith.constant 3 : i32
    %9 = arith.cmpi eq, %arg2, %c3_i32 : i32
    %cst_7 = arith.constant 0.000000e+00 : bf16
    %10 = vector.broadcast %cst_7 : bf16 to vector<1x32xbf16>
    %11 = arith.select %9, %10, %5 : vector<1x32xbf16>
    %12 = tpu.concatenate %8, %1, %11 in 0 : vector<1x32xbf16>, vector<8x32xbf16>, vector<1x32xbf16> -> vector<10x32xbf16>
    %13 = arith.extf %12 : vector<10x32xbf16> to vector<10x32xf32>
    %14 = arith.mulf %13, %13 : vector<10x32xf32>
    %cst_8 = arith.constant dense<0.000000e+00> : vector<10xf32>
    %15 = vector.multi_reduction <add>, %14, %cst_8 [1] : vector<10x32xf32> to vector<10xf32>
    %16 = vector.shape_cast %15 : vector<10xf32> to vector<10x1xf32>
    %17 = math.sqrt %16 : vector<10x1xf32>
    %cst_9 = arith.constant 0.176776692 : f32
    %18 = vector.broadcast %cst_9 : f32 to vector<10x1xf32>
    %19 = arith.mulf %17, %18 : vector<10x1xf32>
    %cst_10 = arith.constant 9.99999974E-5 : f32
    %20 = vector.broadcast %cst_10 : f32 to vector<10x1xf32>
    %21 = arith.addf %20, %19 : vector<10x1xf32>
    %22 = vector.broadcast %21 : vector<10x1xf32> to vector<10x32xf32>
    %23 = arith.divf %13, %22 : vector<10x32xf32>
    %24 = arith.negf %23 : vector<10x32xf32>
    %25 = math.exp %24 : vector<10x32xf32>
    %cst_11 = arith.constant 1.000000e+00 : f32
    %26 = vector.broadcast %cst_11 : f32 to vector<10x32xf32>
    %27 = arith.addf %26, %25 : vector<10x32xf32>
    %28 = arith.divf %26, %27 : vector<10x32xf32>
    %29 = arith.mulf %23, %28 : vector<10x32xf32>
    %cst_12 = arith.constant 1.67785239 : f32
    %30 = vector.broadcast %cst_12 : f32 to vector<10x32xf32>
    %31 = arith.mulf %29, %30 : vector<10x32xf32>
    %32 = arith.truncf %31 : vector<10x32xf32> to vector<10x32xbf16>
    %33 = vector.extract_strided_slice %32 {offsets = [0, 0], sizes = [8, 32], strides = [1, 1]} : vector<10x32xbf16> to vector<8x32xbf16>
    %34 = vector.extract_strided_slice %32 {offsets = [1, 0], sizes = [8, 32], strides = [1, 1]} : vector<10x32xbf16> to vector<8x32xbf16>
    %35 = vector.extract_strided_slice %32 {offsets = [2, 0], sizes = [8, 32], strides = [1, 1]} : vector<10x32xbf16> to vector<8x32xbf16>
    %36 = tpu.concatenate %33, %34, %35 in 1 : vector<8x32xbf16>, vector<8x32xbf16>, vector<8x32xbf16> -> vector<8x96xbf16>
    %c0_13 = arith.constant 0 : index
    %c0_14 = arith.constant 0 : index
    %37 = vector.load %arg6[%c0_13, %c0_14] : memref<96x48xbf16, #tpu.memory_space<vmem>>, vector<96x48xbf16>
    %cst_15 = arith.constant dense<0.000000e+00> : vector<8x48xf32>
    %38 = tpu.matmul %36, %37, %cst_15 {dimension_numbers = #tpu.dot_dimension_numbers<[1], [0], [0], [1], [0, 0, 1, 1], [], []>} : vector<8x96xbf16>, vector<96x48xbf16>, vector<8x48xf32> -> vector<8x48xf32>
    %c0_16 = arith.constant 0 : index
    %c0_17 = arith.constant 0 : index
    %c0_18 = arith.constant 0 : index
    %39 = vector.load %arg7[%c0_16, %c0_17, %c0_18] : memref<1x8x48xf32, #tpu.memory_space<vmem>>, vector<1x8x48xf32>
    %40 = vector.shape_cast %39 : vector<1x8x48xf32> to vector<8x48xf32>
    %41 = vector.shape_cast %38 : vector<8x48xf32> to vector<1x8x48xf32>
    tpu.vector_store %arg7[%c0_16, %c0_17, %c0_18], %41 {strides = array<i32>} : memref<1x8x48xf32, #tpu.memory_space<vmem>>, vector<1x8x48xf32>,
    return
  }
  func.func @transform_0(%arg0: i32, %arg1: i32, %arg2: i32) -> (i32, i32, i32) {
    %c0_i32 = arith.constant 0 : i32
    %c0_i32_0 = arith.constant 0 : i32
    return %arg0, %arg2, %c0_i32 : i32, i32, i32
  }
  func.func @transform_1(%arg0: i32, %arg1: i32, %arg2: i32) -> (i32, i32, i32) {
    %c1_i32 = arith.constant 1 : i32
    %0 = arith.muli %arg2, %c1_i32 : i32
    %c1_i32_0 = arith.constant 1 : i32
    %1 = arith.subi %0, %c1_i32_0 : i32
    %c0_i32 = arith.constant 0 : i32
    %2 = arith.maxsi %1, %c0_i32 : i32
    %c0_i32_1 = arith.constant 0 : i32
    %c0_i32_2 = arith.constant 0 : i32
    return %arg0, %2, %c0_i32_1 : i32, i32, i32
  }
  func.func @transform_2(%arg0: i32, %arg1: i32, %arg2: i32) -> (i32, i32, i32) {
    %c1_i32 = arith.constant 1 : i32
    %0 = arith.addi %arg2, %c1_i32 : i32
    %c1_i32_0 = arith.constant 1 : i32
    %1 = arith.muli %0, %c1_i32_0 : i32
    %c3_i32 = arith.constant 3 : i32
    %2 = arith.minsi %1, %c3_i32 : i32
    %c0_i32 = arith.constant 0 : i32
    %c0_i32_1 = arith.constant 0 : i32
    return %arg0, %2, %c0_i32 : i32, i32, i32
  }
  func.func @transform_3(%arg0: i32, %arg1: i32, %arg2: i32) -> (i32, i32) {
    %c0_i32 = arith.constant 0 : i32
    %c0_i32_0 = arith.constant 0 : i32
    return %c0_i32, %arg1 : i32, i32
  }
  func.func @transform_4(%arg0: i32, %arg1: i32, %arg2: i32) -> (i32, i32, i32) {
    %c0_i32 = arith.constant 0 : i32
    return %arg0, %arg2, %arg1 : i32, i32, i32
  }
}

</mosaic_0001>

<llo_original>
// kernel: tpu_custom_call.1
$region0: #{tpu_custom_call.1}
  #allocation0 [shape = 'u32[]', space=smem, size = 0x4, offset = 0x4, fixed_abs, tag = 'smem constant byte address 0x4 - core index']
  #allocation1 [shape = 'u32[72,128]{1,0:T(1,128)}', space=vmem, size = 0x9000, scoped, tag = 'internal scratch']
  %s0 = inlined_call_operand.vmem [shape: bf16[2,32,32], index: 0, kind: input, shape index: {}]
  %s1 = inlined_call_operand.vmem [shape: bf16[2,32,32], index: 1, kind: input, shape index: {}]
  %s2 = inlined_call_operand.hbm [shape: bf16[2,32,32], index: 2, kind: input, shape index: {}]
  %s3 = inlined_call_operand.vmem [shape: bf16[96,48], index: 3, kind: input, shape index: {}]
  %s4 = inlined_call_operand.hbm [shape: f32[2,32,48], index: 4, kind: output, shape index: {}]
  %s5 = sld [smem:[#allocation0]]
  $region53: #{tpu_custom_call.1} parent=0
    _
  %s7 = ssub.s32 1, %s5
  %s8 = scalar_select 0, %s7, %s5
  $region1: #{tpu_custom_call.1} parent=0
    #allocation2 [shape = 'u8[4096]{0}', space=vmem, size = 0x1000, scoped, tag = 'input window, operand 2']
    #allocation3 [shape = 's32[2]{0}', space=sflag, size = 0x8, scoped, tag = 'scoped memory for tpu_custom_call.1']
    #allocation4 [shape = 's32[2]{0}', space=sflag, size = 0x8, scoped, tag = 'scoped memory for tpu_custom_call.1']
    #allocation5 [shape = 'u8[8192]{0}', space=vmem, size = 0x2000, scoped, tag = 'output window, operand 0']
    %9 = vsyncpa [#allocation3], 0
    %s10 = scalar_lea.sflag [#allocation3], 1
    %11 = vsyncpa %s10, 0
    %12 = vsyncpa [#allocation4], 0
    %s13 = scalar_lea.sflag [#allocation4], 1
    %14 = vsyncpa %s13, 0
    loop: start=0, step=1, limit=10
    $region2: #{tpu_custom_call.1} parent=1 // loop_pre_header
      _
    $region3: #{tpu_custom_call.1} parent=1 // loop_header
      %s16 = sphi 0, %s20
      %p17 = scmp.ge.s32.totalorder %s16, 10
      %s23 = sphi 0, %s42
      %s24 = sphi 0, %s38
      %s25 = sphi 0, %s34
      %s26 = sphi 0, %s23
      %s27 = sphi 0, %s24
      %s28 = sphi 0, %s25
      %s29 = sphi 0, %s26
      %s30 = sphi 0, %s27
      %s31 = sphi 0, %s28
      %s47 = sphi 0, %s49
      %s50 = sphi 0, %s47
      %s51 = sphi 0, %s50
      %s67 = sphi 0, %s51
      %s81 = sphi 0, %s83
      %s84 = sphi 0, %s81
      %s85 = sphi 0, %s84
      %s101 = sphi 0, %s85
      %s115 = sphi 0, %s117
      %s118 = sphi 0, %s115
      %s119 = sphi 0, %s118
      %s135 = sphi 0, %s119
      %s141 = sphi 0, %s143
      %s144 = sphi 0, %s141
      %s145 = sphi 0, %s144
      %s161 = sphi 0, %s145
      %s171 = sphi 0, %s173
      %s174 = sphi 0, %s171
      %s175 = sphi 0, %s174
      %s191 = sphi 0, %s175
    $region4: #{tpu_custom_call.1} parent=1 // loop_header_branch
      %19 = sbr.rel (%p17) target = $region8
    $region5: #{tpu_custom_call.1} parent=1 // loop_body
      %s21 = ssub.s32 %s16, 1
      %s22 = ssub.s32 %s16, 2
      %s32 = sadd.s32 1, %s25
      %p33 = scmp.ge.s32.totalorder %s32, 4
      %s34 = scalar_select %p33, 0, %s32
      %s35 = sadd.s32 1, %s24
      %s36 = scalar_select %p33, %s35, %s24
      %p37 = scmp.ge.s32.totalorder %s36, 1
      %s38 = scalar_select %p37, 0, %s36
      %s39 = sadd.s32 1, %s23
      %s40 = scalar_select %p37, %s39, %s23
      %p41 = scmp.ge.s32.totalorder %s40, 2
      %s42 = scalar_select %p41, 0, %s40
      %s43 = ssub.s32 %s23, %s42
      %s44 = ssub.s32 %s25, %s34
      %s45 = sor.u32 %s43, %s44
      %p46 = scmp.eq.s32.totalorder %s45, 0
      %s48 = sadd.s32 %s47, 1
      %s49 = scalar_select %p46, %s47, %s48
      %p52 = pneg %p46
      %p53 = scmp.eq.s32.totalorder %s16, 7
      %p54 = por %p52, %p53
      %p55 = scmp.ne.s32.totalorder %s47, %s50
      %p56 = scmp.eq.s32.totalorder %s16, 0
      %p57 = por %p55, %p56
      %p58 = scmp.ne.s32.totalorder %s47, %s50
      %p59 = scmp.eq.s32.totalorder %s21, 7
      %p60 = por %p58, %p59
      %p61 = scmp.ne.s32.totalorder %s50, %s51
      %p62 = scmp.eq.s32.totalorder %s21, 0
      %p63 = por %p61, %p62
      %p64 = scmp.ne.s32.totalorder %s50, %s51
      %p65 = scmp.eq.s32.totalorder %s22, 7
      %p66 = por %p64, %p65
      %p68 = scmp.ne.s32.totalorder %s51, %s67
      %p69 = scmp.eq.s32.totalorder %s22, 0
      %p70 = por %p68, %p69
      %s71 = ssub.s32 %s25, 1
      %p72 = scmp.gt.s32.totalorder %s71, 0
      %s73 = scalar_select %p72, %s71, 0
      %s74 = ssub.s32 %s34, 1
      %p75 = scmp.gt.s32.totalorder %s74, 0
      %s76 = scalar_select %p75, %s74, 0
      %s77 = ssub.s32 %s23, %s42
      %s78 = ssub.s32 %s73, %s76
      %s79 = sor.u32 %s77, %s78
      %p80 = scmp.eq.s32.totalorder %s79, 0
      %s82 = sadd.s32 %s81, 1
      %s83 = scalar_select %p80, %s81, %s82
      %p86 = pneg %p80
      %p87 = scmp.eq.s32.totalorder %s16, 7
      %p88 = por %p86, %p87
      %p89 = scmp.ne.s32.totalorder %s81, %s84
      %p90 = scmp.eq.s32.totalorder %s16, 0
      %p91 = por %p89, %p90
      %p92 = scmp.ne.s32.totalorder %s81, %s84
      %p93 = scmp.eq.s32.totalorder %s21, 7
      %p94 = por %p92, %p93
      %p95 = scmp.ne.s32.totalorder %s84, %s85
      %p96 = scmp.eq.s32.totalorder %s21, 0
      %p97 = por %p95, %p96
      %p98 = scmp.ne.s32.totalorder %s84, %s85
      %p99 = scmp.eq.s32.totalorder %s22, 7
      %p100 = por %p98, %p99
      %p102 = scmp.ne.s32.totalorder %s85, %s101
      %p103 = scmp.eq.s32.totalorder %s22, 0
      %p104 = por %p102, %p103
      %s105 = sadd.s32 %s25, 1
      %p106 = scmp.lt.s32.totalorder %s105, 3
      %s107 = scalar_select %p106, %s105, 3
      %s108 = sadd.s32 %s34, 1
      %p109 = scmp.lt.s32.totalorder %s108, 3
      %s110 = scalar_select %p109, %s108, 3
      %s111 = ssub.s32 %s23, %s42
      %s112 = ssub.s32 %s107, %s110
      %s113 = sor.u32 %s111, %s112
      %p114 = scmp.eq.s32.totalorder %s113, 0
      %s116 = sadd.s32 %s115, 1
      %s117 = scalar_select %p114, %s115, %s116
      %p120 = pneg %p114
      %p121 = scmp.eq.s32.totalorder %s16, 7
      %p122 = por %p120, %p121
      %p123 = scmp.ne.s32.totalorder %s115, %s118
      %p124 = scmp.eq.s32.totalorder %s16, 0
      %p125 = por %p123, %p124
      %p126 = scmp.ne.s32.totalorder %s115, %s118
      %p127 = scmp.eq.s32.totalorder %s21, 7
      %p128 = por %p126, %p127
      %p129 = scmp.ne.s32.totalorder %s118, %s119
      %p130 = scmp.eq.s32.totalorder %s21, 0
      %p131 = por %p129, %p130
      %p132 = scmp.ne.s32.totalorder %s118, %s119
      %p133 = scmp.eq.s32.totalorder %s22, 7
      %p134 = por %p132, %p133
      %p136 = scmp.ne.s32.totalorder %s119, %s135
      %p137 = scmp.eq.s32.totalorder %s22, 0
      %p138 = por %p136, %p137
      %s139 = ssub.s32 %s24, %s38
      %p140 = scmp.eq.s32.totalorder %s139, 0
      %s142 = sadd.s32 %s141, 1
      %s143 = scalar_select %p140, %s141, %s142
      %p146 = pneg %p140
      %p147 = scmp.eq.s32.totalorder %s16, 7
      %p148 = por %p146, %p147
      %p149 = scmp.ne.s32.totalorder %s141, %s144
      %p150 = scmp.eq.s32.totalorder %s16, 0
      %p151 = por %p149, %p150
      %p152 = scmp.ne.s32.totalorder %s141, %s144
      %p153 = scmp.eq.s32.totalorder %s21, 7
      %p154 = por %p152, %p153
      %p155 = scmp.ne.s32.totalorder %s144, %s145
      %p156 = scmp.eq.s32.totalorder %s21, 0
      %p157 = por %p155, %p156
      %p158 = scmp.ne.s32.totalorder %s144, %s145
      %p159 = scmp.eq.s32.totalorder %s22, 7
      %p160 = por %p158, %p159
      %p162 = scmp.ne.s32.totalorder %s145, %s161
      %p163 = scmp.eq.s32.totalorder %s22, 0
      %p164 = por %p162, %p163
      %s165 = ssub.s32 %s23, %s42
      %s166 = ssub.s32 %s25, %s34
      %s167 = sor.u32 %s165, %s166
      %s168 = ssub.s32 %s24, %s38
      %s169 = sor.u32 %s167, %s168
      %p170 = scmp.eq.s32.totalorder %s169, 0
      %s172 = sadd.s32 %s171, 1
      %s173 = scalar_select %p170, %s171, %s172
      %p176 = pneg %p170
      %p177 = scmp.eq.s32.totalorder %s16, 7
      %p178 = por %p176, %p177
      %p179 = scmp.ne.s32.totalorder %s171, %s174
      %p180 = scmp.eq.s32.totalorder %s16, 0
      %p181 = por %p179, %p180
      %p182 = scmp.ne.s32.totalorder %s171, %s174
      %p183 = scmp.eq.s32.totalorder %s21, 7
      %p184 = por %p182, %p183
      %p185 = scmp.ne.s32.totalorder %s174, %s175
      %p186 = scmp.eq.s32.totalorder %s21, 0
      %p187 = por %p185, %p186
      %p188 = scmp.ne.s32.totalorder %s174, %s175
      %p189 = scmp.eq.s32.totalorder %s22, 7
      %p190 = por %p188, %p189
      %p192 = scmp.ne.s32.totalorder %s175, %s191
      %p193 = scmp.eq.s32.totalorder %s22, 0
      %p194 = por %p192, %p193
      %p195 = scmp.le.s32.totalorder 1, %s16
      %p196 = scmp.lt.s32.totalorder %s16, 9
      %p197 = pnand %p195, %p196
      %p198 = pneg %p197
      // Predicated region
      $region9: #{tpu_custom_call.1} parent=5 // pred_check
        _
      $region10: #{tpu_custom_call.1} parent=5 // pred_check_branch
        %200 = sbr.rel (%p197) target = $region12
      $region11: #{tpu_custom_call.1} parent=5 // pred_region
        %s201 = ssub.s32 %s16, 1
        // Predicated region
        $region13: #{tpu_custom_call.1} parent=11 // pred_check
          %p202 = pneg %p157
        $region14: #{tpu_custom_call.1} parent=11 // pred_check_branch
          %204 = sbr.rel (%p202) target = $region16
        $region15: #{tpu_custom_call.1} parent=11 // pred_region
          %p205 = scmp.lt.s32.totalorder %s27, 0
          %s206 = scalar_select %p205, %s27, 0
          %s207 = smul.addr %s206, 4
          %s208 = scalar_lea.vmem %s3, %s207
        $region16: #{tpu_custom_call.1} parent=11 // pred_fallthru
          _
      $region12: #{tpu_custom_call.1} parent=5 // pred_fallthru
        _
      %p209 = scmp.lt.s32.totalorder %s16, 8
      // Predicated region
      $region17: #{tpu_custom_call.1} parent=5 // pred_check
        %p210 = pneg %p209
      $region18: #{tpu_custom_call.1} parent=5 // pred_check_branch
        %212 = sbr.rel (%p210) target = $region20
      $region19: #{tpu_custom_call.1} parent=5 // pred_region
        // Predicated region
        $region21: #{tpu_custom_call.1} parent=19 // pred_check
          %p213 = pneg %p57
        $region22: #{tpu_custom_call.1} parent=19 // pred_check_branch
          %215 = sbr.rel (%p213) target = $region24
        $region23: #{tpu_custom_call.1} parent=19 // pred_region
          %p216 = scmp.lt.s32.totalorder %s23, 1
          %s217 = scalar_select %p216, %s23, 1
          %p218 = scmp.lt.s32.totalorder %s25, 3
          %s219 = scalar_select %p218, %s25, 3
          %s220 = smul.addr %s217, 4
          %s221 = sadd.s32 %s219, %s220
          %s222 = smul.addr %s221, 4
          %s223 = scalar_lea.vmem %s0, %s222
        $region24: #{tpu_custom_call.1} parent=19 // pred_fallthru
          _
        // Predicated region
        $region25: #{tpu_custom_call.1} parent=19 // pred_check
          %p224 = pneg %p91
        $region26: #{tpu_custom_call.1} parent=19 // pred_check_branch
          %226 = sbr.rel (%p224) target = $region28
        $region27: #{tpu_custom_call.1} parent=19 // pred_region
          %s227 = ssub.s32 %s25, 1
          %p228 = scmp.gt.s32.totalorder %s227, 0
          %s229 = scalar_select %p228, %s227, 0
          %p230 = scmp.lt.s32.totalorder %s23, 1
          %s231 = scalar_select %p230, %s23, 1
          %p232 = scmp.lt.s32.totalorder %s229, 3
          %s233 = scalar_select %p232, %s229, 3
          %s234 = smul.addr %s231, 4
          %s235 = sadd.s32 %s233, %s234
          %s236 = smul.addr %s235, 4
          %s237 = scalar_lea.vmem %s1, %s236
          %s238 = ssub.s32 %s25, 1
          %p239 = scmp.gt.s32.totalorder %s238, 0
          %s240 = scalar_select %p239, %s238, 0
        $region28: #{tpu_custom_call.1} parent=19 // pred_fallthru
          _
        // Predicated region
        $region29: #{tpu_custom_call.1} parent=19 // pred_check
          %p241 = pneg %p125
        $region30: #{tpu_custom_call.1} parent=19 // pred_check_branch
          %243 = sbr.rel (%p241) target = $region32
        $region31: #{tpu_custom_call.1} parent=19 // pred_region
          %s244 = sand.u32 %s115, 1
          %s245 = scalar_lea.sflag [#allocation3], %s244
          %s246 = sand.u32 %s115, 1
          %s247 = smul.addr %s246, 4
          %s248 = scalar_lea.vmem [#allocation2], %s247
          %s249 = sadd.s32 %s25, 1
          %p250 = scmp.lt.s32.totalorder %s249, 3
          %s251 = scalar_select %p250, %s249, 3
          %253 = vsyncadd %s245, 0
          %s254 = smul.addr %s23, 4
          %s255 = sadd.s32 %s251, %s254
          %s256 = smul.addr %s255, 4
          %s257 = scalar_lea.hbm %s2, %s256
          %s259 = sshll.u32 %s257, 4
          %s260 = int_to_ptr.hbm [resolvable:$true] %s259
          %s261 = sshll.u32 %s248, 4
          %s262 = int_to_ptr.vmem [resolvable:$true] %s261
          %264 = dma.hbm_to_vmem [thread:$0]  %s260, 64, %s262, %s245
        $region32: #{tpu_custom_call.1} parent=19 // pred_fallthru
          _
      $region20: #{tpu_custom_call.1} parent=5 // pred_fallthru
        _
      %p265 = scmp.le.s32.totalorder 1, %s16
      %p266 = scmp.lt.s32.totalorder %s16, 9
      %p267 = pnand %p265, %p266
      %p268 = pneg %p267
      // Predicated region
      $region33: #{tpu_custom_call.1} parent=5 // pred_check
        _
      $region34: #{tpu_custom_call.1} parent=5 // pred_check_branch
        %270 = sbr.rel (%p267) target = $region36
      $region35: #{tpu_custom_call.1} parent=5 // pred_region
        %s271 = ssub.s32 %s16, 1
        %s272 = sand.u32 %s118, 1
        %s273 = scalar_lea.sflag [#allocation3], %s272
        %s274 = sand.u32 %s118, 1
        %s275 = smul.addr %s274, 4
        %s276 = scalar_lea.vmem [#allocation2], %s275
        // Predicated region
        $region37: #{tpu_custom_call.1} parent=35 // pred_check
          %p277 = pneg %p131
        $region38: #{tpu_custom_call.1} parent=35 // pred_check_branch
          %279 = sbr.rel (%p277) target = $region40
        $region39: #{tpu_custom_call.1} parent=35 // pred_region
          %281 = dma.done %s273, 64
        $region40: #{tpu_custom_call.1} parent=35 // pred_fallthru
          _
        %p282 = scmp.lt.s32.totalorder %s26, 1
        %s283 = scalar_select %p282, %s26, 1
        %p284 = scmp.lt.s32.totalorder %s28, 3
        %s285 = scalar_select %p284, %s28, 3
        %s286 = smul.addr %s283, 4
        %s287 = sadd.s32 %s285, %s286
        %s288 = smul.addr %s287, 4
        %s289 = scalar_lea.vmem %s0, %s288
        %p290 = pneg %p63
        %p291 = pneg %p60
        %s292 = ssub.s32 %s28, 1
        %p293 = scmp.gt.s32.totalorder %s292, 0
        %s294 = scalar_select %p293, %s292, 0
        %p295 = scmp.lt.s32.totalorder %s26, 1
        %s296 = scalar_select %p295, %s26, 1
        %p297 = scmp.lt.s32.totalorder %s294, 3
        %s298 = scalar_select %p297, %s294, 3
        %s299 = smul.addr %s296, 4
        %s300 = sadd.s32 %s298, %s299
        %s301 = smul.addr %s300, 4
        %s302 = scalar_lea.vmem %s1, %s301
        %p303 = pneg %p97
        %p304 = pneg %p94
        %s305 = sand.u32 %s118, 1
        %s306 = scalar_lea.sflag [#allocation3], %s305
        %s307 = sand.u32 %s118, 1
        %s308 = smul.addr %s307, 4
        %s309 = scalar_lea.vmem [#allocation2], %s308
        %p310 = pneg %p131
        %p311 = pneg %p128
        %p312 = scmp.lt.s32.totalorder %s27, 0
        %s313 = scalar_select %p312, %s27, 0
        %s314 = smul.addr %s313, 4
        %s315 = scalar_lea.vmem %s3, %s314
        %p316 = pneg %p157
        %p317 = pneg %p154
        %p318 = pneg %p187
        %p319 = pneg %p184
        %s320 = sand.u32 %s174, 1
        %s321 = scalar_lea.sflag [#allocation4], %s320
        %s322 = sand.u32 %s174, 1
        %s323 = smul.addr %s322, 8
        %s324 = scalar_lea.vmem [#allocation5], %s323
        %p325 = scmp.lt.s32.totalorder %s26, 1
        %s326 = scalar_select %p325, %s26, 1
        %p327 = scmp.lt.s32.totalorder %s28, 3
        %s328 = scalar_select %p327, %s28, 3
        %s329 = smul.addr %s326, 4
        %s330 = sadd.s32 %s328, %s329
        %s331 = smul.addr %s330, 4
        %s332 = scalar_lea.vmem %s0, %s331
        %s333 = ssub.s32 %s28, 1
        %p334 = scmp.gt.s32.totalorder %s333, 0
        %s335 = scalar_select %p334, %s333, 0
        %p336 = scmp.lt.s32.totalorder %s26, 1
        %s337 = scalar_select %p336, %s26, 1
        %p338 = scmp.lt.s32.totalorder %s335, 3
        %s339 = scalar_select %p338, %s335, 3
        %s340 = smul.addr %s337, 4
        %s341 = sadd.s32 %s339, %s340
        %s342 = smul.addr %s341, 4
        %s343 = scalar_lea.vmem %s1, %s342
        %s344 = ssub.s32 %s28, 1
        %p345 = scmp.gt.s32.totalorder %s344, 0
        %s346 = scalar_select %p345, %s344, 0
        %s347 = sadd.s32 %s28, 1
        %p348 = scmp.lt.s32.totalorder %s347, 3
        %s349 = scalar_select %p348, %s347, 3
        %p350 = scmp.lt.s32.totalorder %s27, 0
        %s351 = scalar_select %p350, %s27, 0
        %s352 = smul.addr %s351, 4
        %s353 = scalar_lea.vmem %s3, %s352
        %v355 = vld [vmem:[%s332] sm:$0xf]
        %v356 = vld [vmem:[%s343] sm:$0x8]
        %v357 = vld [vmem:[%s276] sm:$0x1]
        %p358 = scmp.eq.s32.totalorder %s28, 0
        %s359 = scalar_select %p358, 1, 0
        %v360 = vstv %s359
        %vm361 = vcmp.eq.s32.totalorder %v360, 1
        %v362 = vsel %vm361, 0, %v356
        %p363 = scmp.eq.s32.totalorder %s28, 3
        %s364 = scalar_select %p363, 1, 0
        %v365 = vstv %s364
        %vm366 = vcmp.eq.s32.totalorder %v365, 1
        %v367 = vsel %vm366, 0, %v357
        %v369 = vunpack.c.l.b16 %v362
        %v370 = vpack.c.b16 %v369, %v369
        %v372 = vshrl.u32 %v370, 16
        %v374 = vrot.slane %v372, 3
        %v377 = vunpack.c.l.b16 %v355
        %v378 = vpack.c.b16 %v377, %v377
        %v380 = vshrl.u32 %v378, 16
        %v382 = vrot.slane %v380, 7
        %v383 = vshll.u32 %v378, 16
        %v385 = vor.u32 %v382, %v383
        %v388 = vunpack.c.l.b16 %v367
        %v389 = vpack.c.b16 %v388, %v388
        %v391 = vshll.u32 %v389, 16
        %v393 = vrot.slane %v391, 4
        %vm395 = vcmask 1040384
        %vm396 = vsmask.f32 256
        %vm397 = vmand %vm395, %vm396
        %v398 = vsel %vm397, %v374, %v385
        %vm399 = vcmask 1044480
        %vm400 = vsmask.f32 4352
        %vm401 = vmand %vm399, %vm400
        %v402 = vsel %vm401, %v398, %v393
        %v403 = vunpack.c.l.bf16 %v402
        %v404 = vunpack.c.h.bf16 %v402
        %v405 = vmul.f32 %v403, %v403
        %v406 = vmul.f32 %v404, %v404
        %vm407 = vcmask 261120
        %v408 = vsel %vm407, %v405, 0.0
        %409 = vadd.xlane.f32.xlu0 %v408
        %v410 = vpop.xlane.xlu0 %409
        %vm411 = vcmask 254976
        %v412 = vsel %vm411, %v406, 0.0
        %413 = vadd.xlane.f32.xlu0 %v412
        %v414 = vpop.xlane.xlu0 %413
        %v415 = vrsqrt.pop %v410
        %v416 = vmul.f32 %v415, %v410
        %v417 = vmul.f32 %v416, %v415
        %v418 = vmul.f32 0.5, %v417
        %v419 = vsub.f32 1.5, %v418
        %v420 = vmul.f32 %v415, %v419
        %v421 = vmul.f32 %v410, %v420
        %vm422 = vcmp.eq.f32.partialorder %v410, inf
        %v423 = vsel %vm422, %v410, %v421
        %vm424 = vcmp.eq.f32.partialorder %v410, 0.0
        %v425 = vand.u32 %v410, 2147483648
        %v426 = vsel %vm424, %v425, %v423
        %v427 = vrsqrt.pop %v414
        %v428 = vmul.f32 %v427, %v414
        %v429 = vmul.f32 %v428, %v427
        %v430 = vmul.f32 0.5, %v429
        %v431 = vsub.f32 1.5, %v430
        %v432 = vmul.f32 %v427, %v431
        %v433 = vmul.f32 %v414, %v432
        %vm434 = vcmp.eq.f32.partialorder %v414, inf
        %v435 = vsel %vm434, %v414, %v433
        %vm436 = vcmp.eq.f32.partialorder %v414, 0.0
        %v437 = vand.u32 %v414, 2147483648
        %v438 = vsel %vm436, %v437, %v435
        %v439 = vmul.f32 %v426, 0.17677669
        %v440 = vmul.f32 %v438, 0.17677669
        %v441 = vadd.f32 %v439, 0.0001
        %v442 = vadd.f32 %v440, 0.0001
        %v443 = vrcp.pop %v441
        %v444 = vmul.f32 %v441, %v443
        %v445 = vsub.f32 1.0, %v444
        %v446 = vmul.f32 %v443, %v445
        %v447 = vadd.f32 %v443, %v446
        %vm448 = vweird.f32 %v441
        %vm449 = vweird.f32 %v443
        %vm450 = vmor %vm448, %vm449
        %v451 = vsel %vm450, %v443, %v447
        %v452 = vand.u32 2147483647, %v441
        %vm453 = vcmp.eq.f32.partialorder %v452, 8.507059e+37
        %v454 = vand.u32 %v441, 2147483648
        %v455 = vor.u32 1.1754944e-38, %v454
        %v456 = vsel %vm453, %v455, %v451
        %v457 = vmul.f32 %v403, %v456
        %v458 = vrcp.pop %v442
        %v459 = vmul.f32 %v442, %v458
        %v460 = vsub.f32 1.0, %v459
        %v461 = vmul.f32 %v458, %v460
        %v462 = vadd.f32 %v458, %v461
        %vm463 = vweird.f32 %v442
        %vm464 = vweird.f32 %v458
        %vm465 = vmor %vm463, %vm464
        %v466 = vsel %vm465, %v458, %v462
        %v467 = vand.u32 2147483647, %v442
        %vm468 = vcmp.eq.f32.partialorder %v467, 8.507059e+37
        %v469 = vand.u32 %v442, 2147483648
        %v470 = vor.u32 1.1754944e-38, %v469
        %v471 = vsel %vm468, %v470, %v466
        %v472 = vmul.f32 %v404, %v471
        %v473 = vxor.u32 %v457, 2147483648
        %v474 = vxor.u32 %v472, 2147483648
        %v475 = vmul.f32 %v473, 1.442695
        %v476 = vpow.pop %v475
        %v477 = vmul.f32 %v474, 1.442695
        %v478 = vpow.pop %v477
        %v479 = vadd.f32 %v476, 1.0
        %v480 = vadd.f32 %v478, 1.0
        %v481 = vrcp.pop %v479
        %v482 = vmul.f32 %v479, %v481
        %v483 = vsub.f32 1.0, %v482
        %v484 = vmul.f32 %v481, %v483
        %v485 = vadd.f32 %v481, %v484
        %vm486 = vweird.f32 %v479
        %vm487 = vweird.f32 %v481
        %vm488 = vmor %vm486, %vm487
        %v489 = vsel %vm488, %v481, %v485
        %v490 = vand.u32 2147483647, %v479
        %vm491 = vcmp.eq.f32.partialorder %v490, 8.507059e+37
        %v492 = vand.u32 %v479, 2147483648
        %v493 = vor.u32 1.1754944e-38, %v492
        %v494 = vsel %vm491, %v493, %v489
        %v495 = vmul.f32 1.0, %v494
        %v496 = vrcp.pop %v480
        %v497 = vmul.f32 %v480, %v496
        %v498 = vsub.f32 1.0, %v497
        %v499 = vmul.f32 %v496, %v498
        %v500 = vadd.f32 %v496, %v499
        %vm501 = vweird.f32 %v480
        %vm502 = vweird.f32 %v496
        %vm503 = vmor %vm501, %vm502
        %v504 = vsel %vm503, %v496, %v500
        %v505 = vand.u32 2147483647, %v480
        %vm506 = vcmp.eq.f32.partialorder %v505, 8.507059e+37
        %v507 = vand.u32 %v480, 2147483648
        %v508 = vor.u32 1.1754944e-38, %v507
        %v509 = vsel %vm506, %v508, %v504
        %v510 = vmul.f32 1.0, %v509
        %v511 = vmul.f32 %v457, %v495
        %v512 = vmul.f32 %v472, %v510
        %v513 = vmul.f32 %v511, 1.6778524
        %v514 = vmul.f32 %v512, 1.6778524
        %v515 = vpack.c.bf16 %v513, %v513
        %v516 = vpack.c.bf16 %v514, %v514
        %v519 = vunpack.c.l.b16 %v515
        %v520 = vunpack.c.l.b16 %v516
        %v521 = vpack.c.b16 %v520, %v519
        %v523 = vshrl.u32 %v521, 16
        %v525 = vshll.u32 %v521, 16
        %v527 = vrot.slane %v525, 1
        %v528 = vor.u32 %v523, %v527
        %529 = vrot.lane.b32.xlu0 %v528, 32
        %v530 = vpop.permute.xlu0 %529
        %v531 = vrot.slane %v521, 1
        %532 = vrot.lane.b32.xlu0 %v531, 64
        %v533 = vpop.permute.xlu0 %532
        %v536 = vsel %vm407, %v515, %v530
        %vm537 = vcmask 523264
        %v539 = vsel %vm537, %v536, %v533
        %v540 = vld [vmem:[%s353] sm:$0xf]
        %v541 = vld [vmem:[%s353 + $0x4] sm:$0xf]
        %v542 = vld [vmem:[%s353 + $0x8] sm:$0xf]
        %v543 = vld [vmem:[%s353 + $0xc] sm:$0xf]
        %v544 = vld [vmem:[%s353 + $0x10] sm:$0xf]
        %v545 = vld [vmem:[%s353 + $0x14] sm:$0xf]
        %v546 = vld [vmem:[%s353 + $0x18] sm:$0xf]
        %v547 = vld [vmem:[%s353 + $0x1c] sm:$0xf]
        %v548 = vld [vmem:[%s353 + $0x20] sm:$0xf]
        %v549 = vld [vmem:[%s353 + $0x24] sm:$0xf]
        %v550 = vld [vmem:[%s353 + $0x28] sm:$0xf]
        %v551 = vld [vmem:[%s353 + $0x2c] sm:$0xf]
        %v564 = vunpack.c.l.b16 %v540
        %v565 = vunpack.c.l.b16 %v541
        %v566 = vunpack.c.l.b16 %v542
        %v567 = vunpack.c.l.b16 %v543
        %v568 = vunpack.c.l.b16 %v544
        %v569 = vunpack.c.l.b16 %v545
        %v570 = vunpack.c.l.b16 %v546
        %v571 = vunpack.c.l.b16 %v547
        %v572 = vunpack.c.l.b16 %v548
        %v573 = vunpack.c.l.b16 %v549
        %v574 = vunpack.c.l.b16 %v550
        %v575 = vunpack.c.l.b16 %v551
        %v576 = vpack.c.b16 %v565, %v564
        %v577 = vpack.c.b16 %v567, %v566
        %v578 = vpack.c.b16 %v569, %v568
        %v579 = vpack.c.b16 %v571, %v570
        %v580 = vpack.c.b16 %v573, %v572
        %v581 = vpack.c.b16 %v575, %v574
        %vm588 = vcmask 785408
        %v589 = vsel %vm588, %v539, 0
        %591 = vmatpush.bf16.msra.mxu0 0
        %592 = vmatpush.bf16.msra.mxu0 0
        %593 = vmatpush.bf16.msra.mxu0 %v581
        %594 = vmatpush.bf16.msra.mxu0 %v580
        %595 = vmatpush.bf16.msra.mxu0 %v579
        %596 = vmatpush.bf16.msra.mxu0 %v578
        %597 = vmatpush.bf16.msra.mxu0 %v577
        %598 = vmatpush.bf16.msra.mxu0 %v576
        %599 = vmatmul.bf16.gmra.mxu0 %v589
        %v600 = vpop.f32.mrf.mxu0
        %v601 = vadd.f32 0.0, %v600
        %v602 = vpop.f32.mrf.mxu0
        %603 = vdwg.mxu0
        %vm604 = vcmask 392192
        %605 = vst.msk [vmem:[%s324] sm:$0xff] %vm604, %v601
        %s606 = sand.u32 %s174, 1
        %s607 = scalar_lea.sflag [#allocation4], %s606
        %s608 = sand.u32 %s174, 1
        %s609 = smul.addr %s608, 8
        %s610 = scalar_lea.vmem [#allocation5], %s609
        // Predicated region
        $region41: #{tpu_custom_call.1} parent=35 // pred_check
          %p611 = pneg %p184
        $region42: #{tpu_custom_call.1} parent=35 // pred_check_branch
          %613 = sbr.rel (%p611) target = $region44
        $region43: #{tpu_custom_call.1} parent=35 // pred_region
          %615 = vsyncadd %s607, 0
          %s616 = sadd.s32 %s27, %s28
          %s617 = smul.addr %s26, 4
          %s618 = sadd.s32 %s616, %s617
          %s619 = smul.addr %s618, 8
          %s620 = scalar_lea.hbm %s4, %s619
          %s622 = sshll.u32 %s610, 4
          %s623 = int_to_ptr.vmem [resolvable:$true] %s622
          %s624 = sshll.u32 %s620, 4
          %s625 = int_to_ptr.hbm [resolvable:$true] %s624
          %627 = dma.vmem_to_hbm [thread:$0]  %s623, 128, %s625, %s607
        $region44: #{tpu_custom_call.1} parent=35 // pred_fallthru
          _
      $region36: #{tpu_custom_call.1} parent=5 // pred_fallthru
        _
      %p628 = scmp.le.s32.totalorder 2, %s16
      // Predicated region
      $region45: #{tpu_custom_call.1} parent=5 // pred_check
        %p629 = pneg %p628
      $region46: #{tpu_custom_call.1} parent=5 // pred_check_branch
        %631 = sbr.rel (%p629) target = $region48
      $region47: #{tpu_custom_call.1} parent=5 // pred_region
        %s632 = ssub.s32 %s16, 2
        // Predicated region
        $region49: #{tpu_custom_call.1} parent=47 // pred_check
          %p633 = pneg %p190
        $region50: #{tpu_custom_call.1} parent=47 // pred_check_branch
          %635 = sbr.rel (%p633) target = $region52
        $region51: #{tpu_custom_call.1} parent=47 // pred_region
          %s636 = sand.u32 %s175, 1
          %s637 = scalar_lea.sflag [#allocation4], %s636
          %s638 = sand.u32 %s175, 1
          %s639 = smul.addr %s638, 8
          %s640 = scalar_lea.vmem [#allocation5], %s639
          %642 = dma.done %s637, 128
        $region52: #{tpu_custom_call.1} parent=47 // pred_fallthru
          _
      $region48: #{tpu_custom_call.1} parent=5 // pred_fallthru
        _
    $region6: #{tpu_custom_call.1} parent=1 // loop_footer
      %s20 = sadd.s32 1, %s16
    $region7: #{tpu_custom_call.1} parent=1 // loop_footer_branch
      %15 = sbr.rel target = $region3
    $region8: #{tpu_custom_call.1} parent=1 // loop_exit
      _
    %643 = vsyncpa [#allocation3], 1
    %s644 = scalar_lea.sflag [#allocation3], 1
    %645 = vsyncpa %s644, 1
    %646 = vsyncpa [#allocation4], 1
    %s647 = scalar_lea.sflag [#allocation4], 1
    %648 = vsyncpa %s647, 1

</llo_original>
